<compile_context>
chip_gen: v7x
topology: tpu7x:2x2x1
jax: 0.10.0
libtpu: 0.0.40
codegen_flags: <defaults>
</compile_context>

<pallas_src>
import jax
import jax.numpy as jnp
from jax.experimental import pallas as pl
from jax.experimental.pallas import tpu as pltpu

# ----- small, forward-consistent sizes -----
B = 2        # batch
S = 8        # encoder sequence length
E = 32       # embedding_dim
H = 32       # encoder_hidden_size == attention_hidden_size
A = H
NCLS = 16    # n_class
NF = 32      # num_filters (Conv1d out channels)

LANES = 128  # lane width of the packed buffers
assert A == H, "attention_hidden_size must equal encoder_hidden_size"
assert 4 * H <= LANES and 2 * H + S + NCLS <= LANES and NCLS + 2 * H + S <= LANES

# --- packed weight buffer row offsets (all 8-row aligned, lane offset 0) ---
R_WHH = 0                        # (H, 4H)    W_hh^T
R_EMBIH = R_WHH + H              # (NCLS, 4H) emb @ W_ih^T   (embedding folded in)
R_BLSTM = R_EMBIH + NCLS         # (1, 4H)    b_ih + b_hh
R_W1 = R_BLSTM + 8               # (H, A)     W_1^T
R_W2 = R_W1 + H                  # (H, A)     W_2^T
R_WOC = R_W2 + H                 # (H, NCLS)  W_out[:, :H]^T   (context half)
R_WOH = R_WOC + H                # (H, NCLS)  W_out[:, H:]^T   (hidden half)
R_MPREV = R_WOH + H              # (S, S)     a @ m_prev -> a[s-1] (0 at s=0)
R_MNEXT = R_MPREV + S            # (S, S)     a @ m_next -> a[s+1] (0 at s=S-1)
R_VEC = R_MNEXT + S              # 6 packed (1, *) rows: k_prev,k_cur,k_next,
W_ROWS = R_VEC + 8               #            b_att+W3@conv_b, v_att, b_out

# --- packed activation / output lane offsets ---
ACT_H0, ACT_C0, ACT_ATTN, ACT_TOK = 0, H, 2 * H, 2 * H + S
OUT_LOGP, OUT_H, OUT_C, OUT_ATTN = 0, NCLS, NCLS + H, NCLS + 2 * H


def decoder_kernel(w_ref, act_ref, enc_ref, out_ref):
    """One fused decode step; all operands already resident in VMEM."""
    f32 = jnp.float32

    # ---- unpack per-step activations (lane slices of one (B, 128) row) ----
    h0 = act_ref[:, ACT_H0:ACT_H0 + H]                       # (B, H)
    c0 = act_ref[:, ACT_C0:ACT_C0 + H]                       # (B, H)
    a = act_ref[:, ACT_ATTN:ACT_ATTN + S]                    # (B, S) prev attn
    onehot = act_ref[:, ACT_TOK:ACT_TOK + NCLS]              # (B, NCLS)

    # ---- single-step LSTM (gate order i, f, g, o); embedding pre-folded ----
    gates = (jnp.dot(onehot, w_ref[R_EMBIH:R_EMBIH + NCLS, :],
                     preferred_element_type=f32)
             + jnp.dot(h0, w_ref[R_WHH:R_WHH + H, :],
                       preferred_element_type=f32)
             + w_ref[R_BLSTM:R_BLSTM + 1, :])                # (B, 4H)
    i_g = jax.nn.sigmoid(gates[:, 0:H])
    f_g = jax.nn.sigmoid(gates[:, H:2 * H])
    g_g = jnp.tanh(gates[:, 2 * H:3 * H])
    o_g = jax.nn.sigmoid(gates[:, 3 * H:4 * H])
    c1 = f_g * c0 + i_g * g_g
    h1 = o_g * jnp.tanh(c1)                                  # decoder output (B, H)

    # ---- Conv1d(k=3,pad=1) folded into W_3: shifted copies of `a` times three
    #      precomputed (1, A) tap vectors (bias merged into b_attc) ----
    a_prev = jnp.dot(a, w_ref[R_MPREV:R_MPREV + S, 0:S],
                     preferred_element_type=f32)             # (B, S)
    a_next = jnp.dot(a, w_ref[R_MNEXT:R_MNEXT + S, 0:S],
                     preferred_element_type=f32)             # (B, S)
    k_prev = w_ref[R_VEC + 0:R_VEC + 1, 0:A]
    k_cur = w_ref[R_VEC + 1:R_VEC + 2, 0:A]
    k_next = w_ref[R_VEC + 2:R_VEC + 3, 0:A]
    b_attc = w_ref[R_VEC + 3:R_VEC + 4, 0:A]                 # W_3@conv_b + b
    v_att = w_ref[R_VEC + 4:R_VEC + 5, 0:A]
    b_out = w_ref[R_VEC + 5:R_VEC + 6, 0:NCLS]
    conv_proj = (a_prev[:, :, None] * k_prev[None]
                 + a[:, :, None] * k_cur[None]
                 + a_next[:, :, None] * k_next[None])        # (B, S, A)

    # ---- hybrid additive attention ----
    enc = enc_ref[...]                                       # (B, S, H)
    enc_proj = jnp.dot(enc.reshape(B * S, H), w_ref[R_W2:R_W2 + H, 0:A],
                       preferred_element_type=f32).reshape(B, S, A)
    dec_proj = jnp.dot(h1, w_ref[R_W1:R_W1 + H, 0:A],
                       preferred_element_type=f32)           # (B, A)
    e = jnp.tanh(dec_proj[:, None, :] + enc_proj + conv_proj + b_attc[None])
    scores = jnp.sum(e * v_att[None], axis=-1)               # (B, S)

    # softmax over encoder time steps
    smax = jnp.max(scores, axis=-1, keepdims=True)
    p = jnp.exp(scores - smax)
    attn = p * pl.reciprocal(jnp.sum(p, axis=-1, keepdims=True), approx=True)

    # ---- context, split output projection (no concat), log_softmax ----
    context = jnp.sum(attn[:, :, None] * enc, axis=1)        # (B, H)
    logits = (jnp.dot(context, w_ref[R_WOC:R_WOC + H, 0:NCLS],
                      preferred_element_type=f32)
              + jnp.dot(h1, w_ref[R_WOH:R_WOH + H, 0:NCLS],
                        preferred_element_type=f32)
              + b_out)                                       # (B, NCLS)
    lmax = jnp.max(logits, axis=-1, keepdims=True)
    lse = jnp.log(jnp.sum(jnp.exp(logits - lmax), axis=-1, keepdims=True)) + lmax
    # dropout is identity in eval/inference mode

    # ---- one lane-dense packed output row: [logp | h1 | c1 | attn | 0-pad] ----
    out_ref[...] = jnp.zeros_like(out_ref)
    out_ref[:, OUT_LOGP:OUT_LOGP + NCLS] = logits - lse
    out_ref[:, OUT_H:OUT_H + H] = h1
    out_ref[:, OUT_C:OUT_C + H] = c1
    out_ref[:, OUT_ATTN:OUT_ATTN + S] = attn


def init_params(key):
    ks = jax.random.split(key, 14)
    u = lambda k, shape: jax.random.uniform(k, shape, jnp.float32, -0.1, 0.1)
    return dict(
        emb=u(ks[0], (NCLS, E)),
        w_ih=u(ks[1], (4 * H, E)),
        w_hh=u(ks[2], (4 * H, H)),
        b_ih=u(ks[3], (4 * H,)),
        b_hh=u(ks[4], (4 * H,)),
        w1=u(ks[5], (A, H)),
        w2=u(ks[6], (A, H)),
        w3=u(ks[7], (A, NF)),
        conv_w=u(ks[8], (NF, 1, 3)),
        conv_b=u(ks[9], (NF,)),
        b_att=u(ks[10], (H,)),
        v_att=u(ks[11], (1, H)),
        w_out=u(ks[12], (NCLS, 2 * H)),
        b_out=u(ks[13], (NCLS,)),
    )


def prepare_weights(p):
    """Fold/pre-transpose all 13 parameter tensors into one (W_ROWS, 128) f32
    buffer (done once, outside the per-step call)."""
    f32 = jnp.float32
    w3 = p['w3']                                             # (A, NF)
    cw = p['conv_w'][:, 0, :]                                # (NF, 3): taps k=0,1,2
    r = jnp.arange(S)[:, None]
    c = jnp.arange(S)[None, :]
    buf = jnp.zeros((W_ROWS, LANES), f32)
    buf = buf.at[R_WHH:R_WHH + H, :4 * H].set(p['w_hh'].T)
    buf = buf.at[R_EMBIH:R_EMBIH + NCLS, :4 * H].set(p['emb'] @ p['w_ih'].T)
    buf = buf.at[R_BLSTM, :4 * H].set(p['b_ih'] + p['b_hh'])
    buf = buf.at[R_W1:R_W1 + H, :A].set(p['w1'].T)
    buf = buf.at[R_W2:R_W2 + H, :A].set(p['w2'].T)
    buf = buf.at[R_WOC:R_WOC + H, :NCLS].set(p['w_out'][:, :H].T)
    buf = buf.at[R_WOH:R_WOH + H, :NCLS].set(p['w_out'][:, H:].T)
    buf = buf.at[R_MPREV:R_MPREV + S, :S].set((r == c - 1).astype(f32))
    buf = buf.at[R_MNEXT:R_MNEXT + S, :S].set((r == c + 1).astype(f32))
    buf = buf.at[R_VEC + 0, :A].set(w3 @ cw[:, 0])           # tap 0 -> a[s-1]
    buf = buf.at[R_VEC + 1, :A].set(w3 @ cw[:, 1])           # tap 1 -> a[s]
    buf = buf.at[R_VEC + 2, :A].set(w3 @ cw[:, 2])           # tap 2 -> a[s+1]
    buf = buf.at[R_VEC + 3, :A].set(w3 @ p['conv_b'] + p['b_att'])
    buf = buf.at[R_VEC + 4, :A].set(p['v_att'][0])
    buf = buf.at[R_VEC + 5, :NCLS].set(p['b_out'])
    return buf


def decoder_forward(wbuf, input_tensor, decoder_hidden, encoder_output, attn_weights):
    """Mirrors Decoder.forward (single decode step).

    wbuf:            packed weights from prepare_weights()
    input_tensor:    (B, 1) int32 token ids
    decoder_hidden:  tuple (h, c), each (1, B, H)
    encoder_output:  (S, B, H)       (PyTorch seq-first)
    attn_weights:    (B, 1, S)       (Conv1d NCL layout)
    returns (log_probs (B, n_class), (h, c) each (1, B, H), attn (S, B, 1))
    """
    f32 = jnp.float32
    onehot = jax.nn.one_hot(input_tensor[:, 0].astype(jnp.int32), NCLS, dtype=f32)
    h0 = decoder_hidden[0][0].astype(f32)                    # (B, H)
    c0 = decoder_hidden[1][0].astype(f32)                    # (B, H)
    enc = jnp.transpose(encoder_output, (1, 0, 2)).astype(f32)   # (B, S, H)
    a_in = attn_weights[:, 0, :].astype(f32)                 # (B, S)

    act = jnp.zeros((B, LANES), f32)
    act = act.at[:, ACT_H0:ACT_H0 + H].set(h0)
    act = act.at[:, ACT_C0:ACT_C0 + H].set(c0)
    act = act.at[:, ACT_ATTN:ACT_ATTN + S].set(a_in)
    act = act.at[:, ACT_TOK:ACT_TOK + NCLS].set(onehot)

    vmem = pl.BlockSpec(memory_space=pltpu.MemorySpace.VMEM)
    packed = pl.pallas_call(
        decoder_kernel,
        out_shape=jax.ShapeDtypeStruct((B, LANES), f32),
        in_specs=[vmem, vmem, vmem],
        out_specs=vmem,
    )(wbuf, act, enc)

    logp = packed[:, OUT_LOGP:OUT_LOGP + NCLS]
    h1 = packed[:, OUT_H:OUT_H + H]
    c1 = packed[:, OUT_C:OUT_C + H]
    attn = packed[:, OUT_ATTN:OUT_ATTN + S]
    new_hidden = (h1[None, :, :], c1[None, :, :])            # each (1, B, H)
    attn_out = jnp.transpose(attn, (1, 0))[:, :, None]       # (S, B, 1)
    return logp, new_hidden, attn_out


if __name__ == "__main__":
    key = jax.random.PRNGKey(0)
    kp, k1, k2, k3, k4, k5 = jax.random.split(key, 6)
    params = init_params(kp)
    wbuf = prepare_weights(params)

    input_tensor = jax.random.randint(k1, (B, 1), 0, NCLS, dtype=jnp.int32)
    h0 = 0.1 * jax.random.normal(k2, (1, B, H), jnp.float32)
    c0 = 0.1 * jax.random.normal(k3, (1, B, H), jnp.float32)
    encoder_output = jax.random.normal(k4, (S, B, H), jnp.float32)
    attn_w = jax.nn.softmax(jax.random.normal(k5, (B, 1, S), jnp.float32), axis=-1)

    fwd = jax.jit(decoder_forward)
    out, hidden, attn = fwd(wbuf, input_tensor, (h0, c0), encoder_output, attn_w)
    jax.block_until_ready((out, hidden, attn))
    assert out.shape == (B, NCLS)
    assert hidden[0].shape == (1, B, H) and hidden[1].shape == (1, B, H)
    assert attn.shape == (S, B, 1)
    print("KERNEL_OK")
</pallas_src>

<mosaic_0001>
module attributes {stable_mosaic.version = 11 : i64} {
  func.func @decoder_kernel(%arg0: memref<208x128xf32, #tpu.memory_space<vmem>>, %arg1: memref<2x128xf32, #tpu.memory_space<vmem>>, %arg2: memref<2x8x32xf32, #tpu.memory_space<vmem>>, %arg3: memref<2x128xf32, #tpu.memory_space<vmem>>) attributes {dimension_semantics = [], scalar_prefetch = 0 : i64, scratch_operands = 0 : i64, tpu.core_type = #tpu.core_type<tc>} {
    %c0 = arith.constant 0 : index
    %c0_0 = arith.constant 0 : index
    %0 = vector.load %arg1[%c0, %c0_0] : memref<2x128xf32, #tpu.memory_space<vmem>>, vector<2x32xf32>
    %c0_1 = arith.constant 0 : index
    %c32 = arith.constant 32 : index
    %1 = vector.load %arg1[%c0_1, %c32] : memref<2x128xf32, #tpu.memory_space<vmem>>, vector<2x32xf32>
    %c0_2 = arith.constant 0 : index
    %c64 = arith.constant 64 : index
    %2 = vector.load %arg1[%c0_2, %c64] : memref<2x128xf32, #tpu.memory_space<vmem>>, vector<2x8xf32>
    %c0_3 = arith.constant 0 : index
    %c72 = arith.constant 72 : index
    %3 = vector.load %arg1[%c0_3, %c72] : memref<2x128xf32, #tpu.memory_space<vmem>>, vector<2x16xf32>
    %c32_4 = arith.constant 32 : index
    %c0_5 = arith.constant 0 : index
    %4 = vector.load %arg0[%c32_4, %c0_5] : memref<208x128xf32, #tpu.memory_space<vmem>>, vector<16x128xf32>
    %cst = arith.constant dense<0.000000e+00> : vector<2x128xf32>
    %5 = tpu.matmul %3, %4, %cst {dimension_numbers = #tpu.dot_dimension_numbers<[1], [0], [0], [1], [0, 0, 1, 1], [], []>} : vector<2x16xf32>, vector<16x128xf32>, vector<2x128xf32> -> vector<2x128xf32>
    %c0_6 = arith.constant 0 : index
    %c0_7 = arith.constant 0 : index
    %6 = vector.load %arg0[%c0_6, %c0_7] : memref<208x128xf32, #tpu.memory_space<vmem>>, vector<32x128xf32>
    %cst_8 = arith.constant dense<0.000000e+00> : vector<2x128xf32>
    %7 = tpu.matmul %0, %6, %cst_8 {dimension_numbers = #tpu.dot_dimension_numbers<[1], [0], [0], [1], [0, 0, 1, 1], [], []>} : vector<2x32xf32>, vector<32x128xf32>, vector<2x128xf32> -> vector<2x128xf32>
    %8 = arith.addf %5, %7 : vector<2x128xf32>
    %c48 = arith.constant 48 : index
    %c0_9 = arith.constant 0 : index
    %9 = vector.load %arg0[%c48, %c0_9] : memref<208x128xf32, #tpu.memory_space<vmem>>, vector<1x128xf32>
    %10 = vector.broadcast %9 : vector<1x128xf32> to vector<2x128xf32>
    %11 = arith.addf %8, %10 : vector<2x128xf32>
    %12 = vector.extract_strided_slice %11 {offsets = [0, 0], sizes = [2, 32], strides = [1, 1]} : vector<2x128xf32> to vector<2x32xf32>
    %13 = arith.negf %12 : vector<2x32xf32>
    %14 = math.exp %13 : vector<2x32xf32>
    %cst_10 = arith.constant 1.000000e+00 : f32
    %15 = vector.broadcast %cst_10 : f32 to vector<2x32xf32>
    %16 = arith.addf %15, %14 : vector<2x32xf32>
    %17 = arith.divf %15, %16 : vector<2x32xf32>
    %18 = vector.extract_strided_slice %11 {offsets = [0, 32], sizes = [2, 32], strides = [1, 1]} : vector<2x128xf32> to vector<2x32xf32>
    %19 = arith.negf %18 : vector<2x32xf32>
    %20 = math.exp %19 : vector<2x32xf32>
    %cst_11 = arith.constant 1.000000e+00 : f32
    %21 = vector.broadcast %cst_11 : f32 to vector<2x32xf32>
    %22 = arith.addf %21, %20 : vector<2x32xf32>
    %23 = arith.divf %21, %22 : vector<2x32xf32>
    %24 = vector.extract_strided_slice %11 {offsets = [0, 64], sizes = [2, 32], strides = [1, 1]} : vector<2x128xf32> to vector<2x32xf32>
    %25 = math.tanh %24 : vector<2x32xf32>
    %26 = vector.extract_strided_slice %11 {offsets = [0, 96], sizes = [2, 32], strides = [1, 1]} : vector<2x128xf32> to vector<2x32xf32>
    %27 = arith.negf %26 : vector<2x32xf32>
    %28 = math.exp %27 : vector<2x32xf32>
    %cst_12 = arith.constant 1.000000e+00 : f32
    %29 = vector.broadcast %cst_12 : f32 to vector<2x32xf32>
    %30 = arith.addf %29, %28 : vector<2x32xf32>
    %31 = arith.divf %29, %30 : vector<2x32xf32>
    %32 = arith.mulf %23, %1 : vector<2x32xf32>
    %33 = arith.mulf %17, %25 : vector<2x32xf32>
    %34 = arith.addf %32, %33 : vector<2x32xf32>
    %35 = math.tanh %34 : vector<2x32xf32>
    %36 = arith.mulf %31, %35 : vector<2x32xf32>
    %c184 = arith.constant 184 : index
    %c0_13 = arith.constant 0 : index
    %37 = vector.load %arg0[%c184, %c0_13] : memref<208x128xf32, #tpu.memory_space<vmem>>, vector<8x8xf32>
    %cst_14 = arith.constant dense<0.000000e+00> : vector<2x8xf32>
    %38 = tpu.matmul %2, %37, %cst_14 {dimension_numbers = #tpu.dot_dimension_numbers<[1], [0], [0], [1], [0, 0, 1, 1], [], []>} : vector<2x8xf32>, vector<8x8xf32>, vector<2x8xf32> -> vector<2x8xf32>
    %c192 = arith.constant 192 : index
    %c0_15 = arith.constant 0 : index
    %39 = vector.load %arg0[%c192, %c0_15] : memref<208x128xf32, #tpu.memory_space<vmem>>, vector<8x8xf32>
    %cst_16 = arith.constant dense<0.000000e+00> : vector<2x8xf32>
    %40 = tpu.matmul %2, %39, %cst_16 {dimension_numbers = #tpu.dot_dimension_numbers<[1], [0], [0], [1], [0, 0, 1, 1], [], []>} : vector<2x8xf32>, vector<8x8xf32>, vector<2x8xf32> -> vector<2x8xf32>
    %c200 = arith.constant 200 : index
    %c0_17 = arith.constant 0 : index
    %41 = vector.load %arg0[%c200, %c0_17] : memref<208x128xf32, #tpu.memory_space<vmem>>, vector<1x32xf32>
    %c201 = arith.constant 201 : index
    %c0_18 = arith.constant 0 : index
    %42 = vector.load %arg0[%c201, %c0_18] : memref<208x128xf32, #tpu.memory_space<vmem>>, vector<1x32xf32>
    %c202 = arith.constant 202 : index
    %c0_19 = arith.constant 0 : index
    %43 = vector.load %arg0[%c202, %c0_19] : memref<208x128xf32, #tpu.memory_space<vmem>>, vector<1x32xf32>
    %c203 = arith.constant 203 : index
    %c0_20 = arith.constant 0 : index
    %44 = vector.load %arg0[%c203, %c0_20] : memref<208x128xf32, #tpu.memory_space<vmem>>, vector<1x32xf32>
    %c204 = arith.constant 204 : index
    %c0_21 = arith.constant 0 : index
    %45 = vector.load %arg0[%c204, %c0_21] : memref<208x128xf32, #tpu.memory_space<vmem>>, vector<1x32xf32>
    %c205 = arith.constant 205 : index
    %c0_22 = arith.constant 0 : index
    %46 = vector.load %arg0[%c205, %c0_22] : memref<208x128xf32, #tpu.memory_space<vmem>>, vector<1x16xf32>
    %47 = vector.shape_cast %38 : vector<2x8xf32> to vector<2x8x1xf32>
    %48 = vector.shape_cast %41 : vector<1x32xf32> to vector<1x1x32xf32>
    %49 = vector.broadcast %47 : vector<2x8x1xf32> to vector<2x8x32xf32>
    %50 = vector.broadcast %48 : vector<1x1x32xf32> to vector<2x8x32xf32>
    %51 = arith.mulf %49, %50 : vector<2x8x32xf32>
    %52 = vector.shape_cast %2 : vector<2x8xf32> to vector<2x8x1xf32>
    %53 = vector.shape_cast %42 : vector<1x32xf32> to vector<1x1x32xf32>
    %54 = vector.broadcast %52 : vector<2x8x1xf32> to vector<2x8x32xf32>
    %55 = vector.broadcast %53 : vector<1x1x32xf32> to vector<2x8x32xf32>
    %56 = arith.mulf %54, %55 : vector<2x8x32xf32>
    %57 = arith.addf %51, %56 : vector<2x8x32xf32>
    %58 = vector.shape_cast %40 : vector<2x8xf32> to vector<2x8x1xf32>
    %59 = vector.shape_cast %43 : vector<1x32xf32> to vector<1x1x32xf32>
    %60 = vector.broadcast %58 : vector<2x8x1xf32> to vector<2x8x32xf32>
    %61 = vector.broadcast %59 : vector<1x1x32xf32> to vector<2x8x32xf32>
    %62 = arith.mulf %60, %61 : vector<2x8x32xf32>
    %63 = arith.addf %57, %62 : vector<2x8x32xf32>
    %c0_23 = arith.constant 0 : index
    %c0_24 = arith.constant 0 : index
    %c0_25 = arith.constant 0 : index
    %64 = vector.load %arg2[%c0_23, %c0_24, %c0_25] : memref<2x8x32xf32, #tpu.memory_space<vmem>>, vector<2x8x32xf32>
    %65 = vector.shape_cast %64 : vector<2x8x32xf32> to vector<16x32xf32>
    %c88 = arith.constant 88 : index
    %c0_26 = arith.constant 0 : index
    %66 = vector.load %arg0[%c88, %c0_26] : memref<208x128xf32, #tpu.memory_space<vmem>>, vector<32x32xf32>
    %cst_27 = arith.constant dense<0.000000e+00> : vector<16x32xf32>
    %67 = tpu.matmul %65, %66, %cst_27 {dimension_numbers = #tpu.dot_dimension_numbers<[1], [0], [0], [1], [0, 0, 1, 1], [], []>} : vector<16x32xf32>, vector<32x32xf32>, vector<16x32xf32> -> vector<16x32xf32>
    %68 = vector.shape_cast %67 : vector<16x32xf32> to vector<2x8x32xf32>
    %c56 = arith.constant 56 : index
    %c0_28 = arith.constant 0 : index
    %69 = vector.load %arg0[%c56, %c0_28] : memref<208x128xf32, #tpu.memory_space<vmem>>, vector<32x32xf32>
    %cst_29 = arith.constant dense<0.000000e+00> : vector<2x32xf32>
    %70 = tpu.matmul %36, %69, %cst_29 {dimension_numbers = #tpu.dot_dimension_numbers<[1], [0], [0], [1], [0, 0, 1, 1], [], []>} : vector<2x32xf32>, vector<32x32xf32>, vector<2x32xf32> -> vector<2x32xf32>
    %71 = vector.shape_cast %70 : vector<2x32xf32> to vector<2x1x32xf32>
    %72 = vector.broadcast %71 : vector<2x1x32xf32> to vector<2x8x32xf32>
    %73 = arith.addf %72, %68 : vector<2x8x32xf32>
    %74 = arith.addf %73, %63 : vector<2x8x32xf32>
    %75 = vector.shape_cast %44 : vector<1x32xf32> to vector<1x1x32xf32>
    %76 = vector.broadcast %75 : vector<1x1x32xf32> to vector<2x8x32xf32>
    %77 = arith.addf %74, %76 : vector<2x8x32xf32>
    %78 = math.tanh %77 : vector<2x8x32xf32>
    %79 = vector.shape_cast %45 : vector<1x32xf32> to vector<1x1x32xf32>
    %80 = vector.broadcast %79 : vector<1x1x32xf32> to vector<2x8x32xf32>
    %81 = arith.mulf %78, %80 : vector<2x8x32xf32>
    %cst_30 = arith.constant dense<0.000000e+00> : vector<2x8xf32>
    %82 = vector.multi_reduction <add>, %81, %cst_30 [2] : vector<2x8x32xf32> to vector<2x8xf32>
    %cst_31 = arith.constant dense<0xFF800000> : vector<2xf32>
    %83 = vector.multi_reduction <maximumf>, %82, %cst_31 [1] : vector<2x8xf32> to vector<2xf32>
    %84 = vector.shape_cast %83 : vector<2xf32> to vector<2x1xf32>
    %85 = vector.broadcast %84 : vector<2x1xf32> to vector<2x8xf32>
    %86 = arith.subf %82, %85 : vector<2x8xf32>
    %87 = math.exp %86 : vector<2x8xf32>
    %cst_32 = arith.constant dense<0.000000e+00> : vector<2xf32>
    %88 = vector.multi_reduction <add>, %87, %cst_32 [1] : vector<2x8xf32> to vector<2xf32>
    %89 = vector.shape_cast %88 : vector<2xf32> to vector<2x1xf32>
    %90 = tpu.reciprocal %89 {approx = true} : vector<2x1xf32> -> vector<2x1xf32>
    %91 = vector.broadcast %90 : vector<2x1xf32> to vector<2x8xf32>
    %92 = arith.mulf %87, %91 : vector<2x8xf32>
    %93 = vector.shape_cast %92 : vector<2x8xf32> to vector<2x8x1xf32>
    %94 = vector.broadcast %93 : vector<2x8x1xf32> to vector<2x8x32xf32>
    %95 = arith.mulf %94, %64 : vector<2x8x32xf32>
    %cst_33 = arith.constant dense<0.000000e+00> : vector<2x32xf32>
    %96 = vector.multi_reduction <add>, %95, %cst_33 [1] : vector<2x8x32xf32> to vector<2x32xf32>
    %c120 = arith.constant 120 : index
    %c0_34 = arith.constant 0 : index
    %97 = vector.load %arg0[%c120, %c0_34] : memref<208x128xf32, #tpu.memory_space<vmem>>, vector<32x16xf32>
    %cst_35 = arith.constant dense<0.000000e+00> : vector<2x16xf32>
    %98 = tpu.matmul %96, %97, %cst_35 {dimension_numbers = #tpu.dot_dimension_numbers<[1], [0], [0], [1], [0, 0, 1, 1], [], []>} : vector<2x32xf32>, vector<32x16xf32>, vector<2x16xf32> -> vector<2x16xf32>
    %c152 = arith.constant 152 : index
    %c0_36 = arith.constant 0 : index
    %99 = vector.load %arg0[%c152, %c0_36] : memref<208x128xf32, #tpu.memory_space<vmem>>, vector<32x16xf32>
    %cst_37 = arith.constant dense<0.000000e+00> : vector<2x16xf32>
    %100 = tpu.matmul %36, %99, %cst_37 {dimension_numbers = #tpu.dot_dimension_numbers<[1], [0], [0], [1], [0, 0, 1, 1], [], []>} : vector<2x32xf32>, vector<32x16xf32>, vector<2x16xf32> -> vector<2x16xf32>
    %101 = arith.addf %98, %100 : vector<2x16xf32>
    %102 = vector.broadcast %46 : vector<1x16xf32> to vector<2x16xf32>
    %103 = arith.addf %101, %102 : vector<2x16xf32>
    %cst_38 = arith.constant dense<0xFF800000> : vector<2xf32>
    %104 = vector.multi_reduction <maximumf>, %103, %cst_38 [1] : vector<2x16xf32> to vector<2xf32>
    %105 = vector.shape_cast %104 : vector<2xf32> to vector<2x1xf32>
    %106 = vector.broadcast %105 : vector<2x1xf32> to vector<2x16xf32>
    %107 = arith.subf %103, %106 : vector<2x16xf32>
    %108 = math.exp %107 : vector<2x16xf32>
    %cst_39 = arith.constant dense<0.000000e+00> : vector<2xf32>
    %109 = vector.multi_reduction <add>, %108, %cst_39 [1] : vector<2x16xf32> to vector<2xf32>
    %110 = vector.shape_cast %109 : vector<2xf32> to vector<2x1xf32>
    %111 = math.log %110 : vector<2x1xf32>
    %112 = arith.addf %111, %105 : vector<2x1xf32>
    %cst_40 = arith.constant 0.000000e+00 : f32
    %113 = vector.broadcast %cst_40 : f32 to vector<2x128xf32>
    %c0_41 = arith.constant 0 : index
    %c0_42 = arith.constant 0 : index
    %114 = vector.load %arg3[%c0_41, %c0_42] : memref<2x128xf32, #tpu.memory_space<vmem>>, vector<2x128xf32>
    tpu.vector_store %arg3[%c0_41, %c0_42], %113 {strides = array<i32>} : memref<2x128xf32, #tpu.memory_space<vmem>>, vector<2x128xf32>,
    %115 = vector.broadcast %112 : vector<2x1xf32> to vector<2x16xf32>
    %116 = arith.subf %103, %115 : vector<2x16xf32>
    %c0_43 = arith.constant 0 : index
    %c0_44 = arith.constant 0 : index
    %117 = vector.load %arg3[%c0_43, %c0_44] : memref<2x128xf32, #tpu.memory_space<vmem>>, vector<2x16xf32>
    tpu.vector_store %arg3[%c0_43, %c0_44], %116 {strides = array<i32>} : memref<2x128xf32, #tpu.memory_space<vmem>>, vector<2x16xf32>,
    %c0_45 = arith.constant 0 : index
    %c16 = arith.constant 16 : index
    %118 = vector.load %arg3[%c0_45, %c16] : memref<2x128xf32, #tpu.memory_space<vmem>>, vector<2x32xf32>
    tpu.vector_store %arg3[%c0_45, %c16], %36 {strides = array<i32>} : memref<2x128xf32, #tpu.memory_space<vmem>>, vector<2x32xf32>,
    %c0_46 = arith.constant 0 : index
    %c48_47 = arith.constant 48 : index
    %119 = vector.load %arg3[%c0_46, %c48_47] : memref<2x128xf32, #tpu.memory_space<vmem>>, vector<2x32xf32>
    tpu.vector_store %arg3[%c0_46, %c48_47], %34 {strides = array<i32>} : memref<2x128xf32, #tpu.memory_space<vmem>>, vector<2x32xf32>,
    %c0_48 = arith.constant 0 : index
    %c80 = arith.constant 80 : index
    %120 = vector.load %arg3[%c0_48, %c80] : memref<2x128xf32, #tpu.memory_space<vmem>>, vector<2x8xf32>
    tpu.vector_store %arg3[%c0_48, %c80], %92 {strides = array<i32>} : memref<2x128xf32, #tpu.memory_space<vmem>>, vector<2x8xf32>,
    return
  }
}

</mosaic_0001>

<llo_original>
// kernel: decoder_forward.1
$region0: #{decoder_forward.1}
  #allocation0 [shape = 'u32[]', space=smem, size = 0x4, offset = 0x4, fixed_abs, tag = 'smem constant byte address 0x4 - core index']
  #allocation1 [shape = 'u32[144,128]{1,0:T(1,128)}', space=vmem, size = 0x12000, scoped, tag = 'internal scratch']
  %s0 = inlined_call_operand.hbm [shape: f32[208,128], index: 0, kind: input, shape index: {}]
  %s1 = inlined_call_operand.vmem [shape: f32[2,128], index: 1, kind: input, shape index: {}]
  %s2 = inlined_call_operand.vmem [shape: f32[2,8,32], index: 2, kind: input, shape index: {}]
  %s3 = inlined_call_operand.vmem [shape: f32[2,128], index: 3, kind: output, shape index: {}]
  %s4 = sld [smem:[#allocation0]]
  $region26: #{decoder_forward.1} parent=0
    _
  %s6 = ssub.s32 1, %s4
  %s7 = scalar_select 0, %s6, %s4
  $region1: #{decoder_forward.1} parent=0
    #allocation2 [shape = 'u8[106496]{0}', space=vmem, size = 0x1a000, scoped, tag = 'input window, operand 0, single buffered']
    #allocation3 [shape = 's32[1]{0}', space=sflag, size = 0x4, scoped, tag = 'scoped memory for decoder_forward.1']
    %8 = vsyncpa [#allocation3], 0
    // Predicated region
    $region2: #{decoder_forward.1} parent=1 // pred_check
      _
    $region3: #{decoder_forward.1} parent=1 // pred_check_branch
      %10 = sbr.rel (0) target = $region5
    $region4: #{decoder_forward.1} parent=1 // pred_region
      %s12 = ssub.s32 3328, 3328
      %13 = vsyncadd [#allocation3], %s12
      %s14 = sshll.u32 [#allocation2], 4
      %s15 = int_to_ptr.vmem [resolvable:$true] %s14
      %20 = dma.hbm_to_vmem [thread:$0]  %s0, 3328, %s15, [#allocation3], 128, 128, 8
    $region5: #{decoder_forward.1} parent=1 // pred_fallthru
      _
    // Predicated region
    $region6: #{decoder_forward.1} parent=1 // pred_check
      _
    $region7: #{decoder_forward.1} parent=1 // pred_check_branch
      %22 = sbr.rel (0) target = $region9
    $region8: #{decoder_forward.1} parent=1 // pred_region
      _
    $region9: #{decoder_forward.1} parent=1 // pred_fallthru
      _
    // Predicated region
    $region10: #{decoder_forward.1} parent=1 // pred_check
      _
    $region11: #{decoder_forward.1} parent=1 // pred_check_branch
      %24 = sbr.rel (0) target = $region13
    $region12: #{decoder_forward.1} parent=1 // pred_region
      _
    $region13: #{decoder_forward.1} parent=1 // pred_fallthru
      _
    // Predicated region
    $region14: #{decoder_forward.1} parent=1 // pred_check
      _
    $region15: #{decoder_forward.1} parent=1 // pred_check_branch
      %26 = sbr.rel (0) target = $region17
    $region16: #{decoder_forward.1} parent=1 // pred_region
      %27 = dma.done [#allocation3], 3328
    $region17: #{decoder_forward.1} parent=1 // pred_fallthru
      _
    %v28 = vld [vmem:[%s1] sm:$0x3]
    %v29 = vld [vmem:[#allocation2 + $0x20] sm:$0xff]
    %v30 = vld [vmem:[#allocation2 + $0x28] sm:$0xff]
    %v31 = vld [vmem:[#allocation2] sm:$0xff]
    %v32 = vld [vmem:[#allocation2 + $0x8] sm:$0xff]
    %v33 = vld [vmem:[#allocation2 + $0x10] sm:$0xff]
    %v34 = vld [vmem:[#allocation2 + $0x18] sm:$0xff]
    %vm35 = vcmask 261120
    %v37 = vsel %vm35, %v28, 0
    %39 = vmatprep.subr.mxu0 0.0
    %40 = vmatpush1.msra.mxu0 %v31
    %41 = vmatprep.subr.mxu0 0.0
    %42 = vmatpush1.msra.mxu0 %v32
    %43 = vmatprep.subr.mxu0 0.0
    %44 = vmatpush1.msra.mxu0 %v33
    %45 = vmatprep.subr.mxu0 0.0
    %46 = vmatpush1.msra.mxu0 %v34
    %47 = vmatprep.subr.mxu0 0.0
    %48 = vmatpush1.msra.mxu0 0.0
    %49 = vmatprep.subr.mxu0 0.0
    %50 = vmatpush1.msra.mxu0 0.0
    %51 = vmatprep.subr.mxu0 0.0
    %52 = vmatpush1.msra.mxu0 0.0
    %53 = vmatprep.subr.mxu0 0.0
    %54 = vmatpush1.msra.mxu0 0.0
    %55 = vmatprep.subr.mxu0 0.0
    %56 = vmatpush1.msra.mxu0 0.0
    %57 = vmatprep.subr.mxu0 0.0
    %58 = vmatpush1.msra.mxu0 0.0
    %59 = vmatprep.subr.mxu0 0.0
    %60 = vmatpush1.msra.mxu0 0.0
    %61 = vmatprep.subr.mxu0 0.0
    %62 = vmatpush1.msra.mxu0 0.0
    %63 = vmatprep.subr.mxu0 0.0
    %64 = vmatpush1.msra.mxu0 0.0
    %65 = vmatprep.subr.mxu0 0.0
    %66 = vmatpush1.msra.mxu0 0.0
    %67 = vmatprep.subr.mxu0 0.0
    %68 = vmatpush1.msra.mxu0 0.0
    %69 = vmatprep.subr.mxu0 0.0
    %70 = vmatpush1.msra.mxu0 0.0
    %71 = vmatprep.subr.mxu0 0.0
    %72 = vmatpush1.msra.mxu0 0.0
    %73 = vmatprep.subr.mxu0 0.0
    %74 = vmatpush1.msra.mxu0 0.0
    %75 = vmatprep.subr.mxu0 0.0
    %76 = vmatpush1.msra.mxu0 0.0
    %77 = vmatprep.subr.mxu0 0.0
    %78 = vmatpush1.msra.mxu0 0.0
    %79 = vmatprep.subr.mxu0 0.0
    %80 = vmatpush1.msra.mxu0 0.0
    %81 = vmatprep.subr.mxu0 0.0
    %82 = vmatpush1.msra.mxu0 0.0
    %83 = vmatprep.subr.mxu0 0.0
    %84 = vmatpush1.msra.mxu0 0.0
    %85 = vmatprep.subr.mxu0 0.0
    %86 = vmatpush1.msra.mxu0 0.0
    %87 = vmatprep.subr.mxu0 0.0
    %88 = vmatpush1.msra.mxu0 0.0
    %89 = vmatprep.subr.mxu0 0.0
    %90 = vmatpush1.msra.mxu0 0.0
    %91 = vmatprep.subr.mxu0 0.0
    %92 = vmatpush1.msra.mxu0 0.0
    %93 = vmatprep.subr.mxu0 0.0
    %94 = vmatpush1.msra.mxu0 0.0
    %95 = vmatprep.subr.mxu0 0.0
    %96 = vmatpush1.msra.mxu0 0.0
    %97 = vmatprep.subr.mxu0 0.0
    %98 = vmatpush1.msra.mxu0 0.0
    %99 = vmatprep.subr.mxu0 0.0
    %100 = vmatpush1.msra.mxu0 0.0
    %101 = vmatprep.subr.mxu0 0.0
    %102 = vmatpush1.msra.mxu0 0.0
    %103 = vmatprep.mubr.f32.mxu0 0.0
    %104 = vmatmul.mubr.f32.gmra.mrb[0].mxu0 %v37
    %v105 = vpop.f32.mrb[0].mxu0
    %v106 = vadd.f32 0.0, %v105
    %v107 = vpop.f32.mrb[0].mxu0
    %108 = vdwg.mxu0
    %109 = vrot.lane.b32.xlu0 %v28, 56
    %v110 = vpop.permute.xlu0 %109
    %vm111 = vcmask 130048
    %v112 = vsel %vm111, %v110, 0
    %114 = vmatprep.subr.mxu0 0.0
    %115 = vmatpush1.msra.mxu0 %v29
    %116 = vmatprep.subr.mxu0 0.0
    %117 = vmatpush1.msra.mxu0 %v30
    %118 = vmatprep.subr.mxu0 0.0
    %119 = vmatpush1.msra.mxu0 0.0
    %120 = vmatprep.subr.mxu0 0.0
    %121 = vmatpush1.msra.mxu0 0.0
    %122 = vmatprep.subr.mxu0 0.0
    %123 = vmatpush1.msra.mxu0 0.0
    %124 = vmatprep.subr.mxu0 0.0
    %125 = vmatpush1.msra.mxu0 0.0
    %126 = vmatprep.subr.mxu0 0.0
    %127 = vmatpush1.msra.mxu0 0.0
    %128 = vmatprep.subr.mxu0 0.0
    %129 = vmatpush1.msra.mxu0 0.0
    %130 = vmatprep.subr.mxu0 0.0
    %131 = vmatpush1.msra.mxu0 0.0
    %132 = vmatprep.subr.mxu0 0.0
    %133 = vmatpush1.msra.mxu0 0.0
    %134 = vmatprep.subr.mxu0 0.0
    %135 = vmatpush1.msra.mxu0 0.0
    %136 = vmatprep.subr.mxu0 0.0
    %137 = vmatpush1.msra.mxu0 0.0
    %138 = vmatprep.subr.mxu0 0.0
    %139 = vmatpush1.msra.mxu0 0.0
    %140 = vmatprep.subr.mxu0 0.0
    %141 = vmatpush1.msra.mxu0 0.0
    %142 = vmatprep.subr.mxu0 0.0
    %143 = vmatpush1.msra.mxu0 0.0
    %144 = vmatprep.subr.mxu0 0.0
    %145 = vmatpush1.msra.mxu0 0.0
    %146 = vmatprep.subr.mxu0 0.0
    %147 = vmatpush1.msra.mxu0 0.0
    %148 = vmatprep.subr.mxu0 0.0
    %149 = vmatpush1.msra.mxu0 0.0
    %150 = vmatprep.subr.mxu0 0.0
    %151 = vmatpush1.msra.mxu0 0.0
    %152 = vmatprep.subr.mxu0 0.0
    %153 = vmatpush1.msra.mxu0 0.0
    %154 = vmatprep.subr.mxu0 0.0
    %155 = vmatpush1.msra.mxu0 0.0
    %156 = vmatprep.subr.mxu0 0.0
    %157 = vmatpush1.msra.mxu0 0.0
    %158 = vmatprep.subr.mxu0 0.0
    %159 = vmatpush1.msra.mxu0 0.0
    %160 = vmatprep.subr.mxu0 0.0
    %161 = vmatpush1.msra.mxu0 0.0
    %162 = vmatprep.subr.mxu0 0.0
    %163 = vmatpush1.msra.mxu0 0.0
    %164 = vmatprep.subr.mxu0 0.0
    %165 = vmatpush1.msra.mxu0 0.0
    %166 = vmatprep.subr.mxu0 0.0
    %167 = vmatpush1.msra.mxu0 0.0
    %168 = vmatprep.subr.mxu0 0.0
    %169 = vmatpush1.msra.mxu0 0.0
    %170 = vmatprep.subr.mxu0 0.0
    %171 = vmatpush1.msra.mxu0 0.0
    %172 = vmatprep.subr.mxu0 0.0
    %173 = vmatpush1.msra.mxu0 0.0
    %174 = vmatprep.subr.mxu0 0.0
    %175 = vmatpush1.msra.mxu0 0.0
    %176 = vmatprep.subr.mxu0 0.0
    %177 = vmatpush1.msra.mxu0 0.0
    %178 = vmatprep.mubr.f32.mxu0 0.0
    %179 = vmatmul.mubr.f32.gmra.mrb[0].mxu0 %v112
    %v180 = vpop.f32.mrb[0].mxu0
    %v181 = vadd.f32 %v106, %v180
    %v182 = vpop.f32.mrb[0].mxu0
    %183 = vdwg.mxu0
    %v184 = vld [vmem:[#allocation2 + $0x30] sm:$0x1]
    %v185 = vlaneseq
    %v186 = vshrl.u32 %v185, 7
    %v187 = vsub.s32 0, %v186
    %v188 = vrot.slane %v184, %v187
    %v189 = vadd.f32 %v181, %v188
    %v190 = vxor.u32 %v189, 2147483648
    %v191 = vmul.f32 %v190, 1.442695
    %v192 = vpow.pop %v191
    %v193 = vadd.f32 %v192, 1.0
    %v194 = vrcp.pop %v193
    %v195 = vmul.f32 1.0, %v194
    %v196 = vtanh.pop %v189
    %v197 = vmul.f32 %v195, %v28
    %199 = vrot.lane.b32.xlu0 %v196, 64
    %v200 = vpop.permute.xlu0 %199
    %v202 = vmul.f32 %v195, %v200
    %204 = vrot.lane.b32.xlu0 %v202, 32
    %v205 = vpop.permute.xlu0 %204
    %v207 = vadd.f32 %v197, %v205
    %v208 = vtanh.pop %v207
    %210 = vrot.lane.b32.xlu0 %v208, 64
    %v211 = vpop.permute.xlu0 %210
    %v213 = vmul.f32 %v195, %v211
    %v214 = vld [vmem:[#allocation2 + $0xb8] sm:$0xff]
    %215 = vrot.lane.b32.xlu0 %v28, 64
    %v216 = vpop.permute.xlu0 %215
    %vm217 = vcmask 64512
    %v218 = vsel %vm217, %v216, 0
    %220 = vmatprep.subr.mxu0 0.0
    %221 = vmatpush1.msra.mxu0 %v214
    %222 = vmatprep.subr.mxu0 0.0
    %223 = vmatpush1.msra.mxu0 0.0
    %224 = vmatprep.subr.mxu0 0.0
    %225 = vmatpush1.msra.mxu0 0.0
    %226 = vmatprep.subr.mxu0 0.0
    %227 = vmatpush1.msra.mxu0 0.0
    %228 = vmatprep.subr.mxu0 0.0
    %229 = vmatpush1.msra.mxu0 0.0
    %230 = vmatprep.subr.mxu0 0.0
    %231 = vmatpush1.msra.mxu0 0.0
    %232 = vmatprep.subr.mxu0 0.0
    %233 = vmatpush1.msra.mxu0 0.0
    %234 = vmatprep.subr.mxu0 0.0
    %235 = vmatpush1.msra.mxu0 0.0
    %236 = vmatprep.subr.mxu0 0.0
    %237 = vmatpush1.msra.mxu0 0.0
    %238 = vmatprep.subr.mxu0 0.0
    %239 = vmatpush1.msra.mxu0 0.0
    %240 = vmatprep.subr.mxu0 0.0
    %241 = vmatpush1.msra.mxu0 0.0
    %242 = vmatprep.subr.mxu0 0.0
    %243 = vmatpush1.msra.mxu0 0.0
    %244 = vmatprep.subr.mxu0 0.0
    %245 = vmatpush1.msra.mxu0 0.0
    %246 = vmatprep.subr.mxu0 0.0
    %247 = vmatpush1.msra.mxu0 0.0
    %248 = vmatprep.subr.mxu0 0.0
    %249 = vmatpush1.msra.mxu0 0.0
    %250 = vmatprep.subr.mxu0 0.0
    %251 = vmatpush1.msra.mxu0 0.0
    %252 = vmatprep.subr.mxu0 0.0
    %253 = vmatpush1.msra.mxu0 0.0
    %254 = vmatprep.subr.mxu0 0.0
    %255 = vmatpush1.msra.mxu0 0.0
    %256 = vmatprep.subr.mxu0 0.0
    %257 = vmatpush1.msra.mxu0 0.0
    %258 = vmatprep.subr.mxu0 0.0
    %259 = vmatpush1.msra.mxu0 0.0
    %260 = vmatprep.subr.mxu0 0.0
    %261 = vmatpush1.msra.mxu0 0.0
    %262 = vmatprep.subr.mxu0 0.0
    %263 = vmatpush1.msra.mxu0 0.0
    %264 = vmatprep.subr.mxu0 0.0
    %265 = vmatpush1.msra.mxu0 0.0
    %266 = vmatprep.subr.mxu0 0.0
    %267 = vmatpush1.msra.mxu0 0.0
    %268 = vmatprep.subr.mxu0 0.0
    %269 = vmatpush1.msra.mxu0 0.0
    %270 = vmatprep.subr.mxu0 0.0
    %271 = vmatpush1.msra.mxu0 0.0
    %272 = vmatprep.subr.mxu0 0.0
    %273 = vmatpush1.msra.mxu0 0.0
    %274 = vmatprep.subr.mxu0 0.0
    %275 = vmatpush1.msra.mxu0 0.0
    %276 = vmatprep.subr.mxu0 0.0
    %277 = vmatpush1.msra.mxu0 0.0
    %278 = vmatprep.subr.mxu0 0.0
    %279 = vmatpush1.msra.mxu0 0.0
    %280 = vmatprep.subr.mxu0 0.0
    %281 = vmatpush1.msra.mxu0 0.0
    %282 = vmatprep.subr.mxu0 0.0
    %283 = vmatpush1.msra.mxu0 0.0
    %284 = vmatprep.mubr.f32.mxu0 0.0
    %285 = vmatmul.mubr.f32.gmra.mrb[0].mxu0 %v218
    %v286 = vpop.f32.mrb[0].mxu0
    %v287 = vadd.f32 0.0, %v286
    %v288 = vpop.f32.mrb[0].mxu0
    %289 = vdwg.mxu0
    %v290 = vld [vmem:[#allocation2 + $0xc0] sm:$0xff]
    %291 = vmatprep.subr.mxu0 0.0
    %292 = vmatpush1.msra.mxu0 %v290
    %293 = vmatprep.subr.mxu0 0.0
    %294 = vmatpush1.msra.mxu0 0.0
    %295 = vmatprep.subr.mxu0 0.0
    %296 = vmatpush1.msra.mxu0 0.0
    %297 = vmatprep.subr.mxu0 0.0
    %298 = vmatpush1.msra.mxu0 0.0
    %299 = vmatprep.subr.mxu0 0.0
    %300 = vmatpush1.msra.mxu0 0.0
    %301 = vmatprep.subr.mxu0 0.0
    %302 = vmatpush1.msra.mxu0 0.0
    %303 = vmatprep.subr.mxu0 0.0
    %304 = vmatpush1.msra.mxu0 0.0
    %305 = vmatprep.subr.mxu0 0.0
    %306 = vmatpush1.msra.mxu0 0.0
    %307 = vmatprep.subr.mxu0 0.0
    %308 = vmatpush1.msra.mxu0 0.0
    %309 = vmatprep.subr.mxu0 0.0
    %310 = vmatpush1.msra.mxu0 0.0
    %311 = vmatprep.subr.mxu0 0.0
    %312 = vmatpush1.msra.mxu0 0.0
    %313 = vmatprep.subr.mxu0 0.0
    %314 = vmatpush1.msra.mxu0 0.0
    %315 = vmatprep.subr.mxu0 0.0
    %316 = vmatpush1.msra.mxu0 0.0
    %317 = vmatprep.subr.mxu0 0.0
    %318 = vmatpush1.msra.mxu0 0.0
    %319 = vmatprep.subr.mxu0 0.0
    %320 = vmatpush1.msra.mxu0 0.0
    %321 = vmatprep.subr.mxu0 0.0
    %322 = vmatpush1.msra.mxu0 0.0
    %323 = vmatprep.subr.mxu0 0.0
    %324 = vmatpush1.msra.mxu0 0.0
    %325 = vmatprep.subr.mxu0 0.0
    %326 = vmatpush1.msra.mxu0 0.0
    %327 = vmatprep.subr.mxu0 0.0
    %328 = vmatpush1.msra.mxu0 0.0
    %329 = vmatprep.subr.mxu0 0.0
    %330 = vmatpush1.msra.mxu0 0.0
    %331 = vmatprep.subr.mxu0 0.0
    %332 = vmatpush1.msra.mxu0 0.0
    %333 = vmatprep.subr.mxu0 0.0
    %334 = vmatpush1.msra.mxu0 0.0
    %335 = vmatprep.subr.mxu0 0.0
    %336 = vmatpush1.msra.mxu0 0.0
    %337 = vmatprep.subr.mxu0 0.0
    %338 = vmatpush1.msra.mxu0 0.0
    %339 = vmatprep.subr.mxu0 0.0
    %340 = vmatpush1.msra.mxu0 0.0
    %341 = vmatprep.subr.mxu0 0.0
    %342 = vmatpush1.msra.mxu0 0.0
    %343 = vmatprep.subr.mxu0 0.0
    %344 = vmatpush1.msra.mxu0 0.0
    %345 = vmatprep.subr.mxu0 0.0
    %346 = vmatpush1.msra.mxu0 0.0
    %347 = vmatprep.subr.mxu0 0.0
    %348 = vmatpush1.msra.mxu0 0.0
    %349 = vmatprep.subr.mxu0 0.0
    %350 = vmatpush1.msra.mxu0 0.0
    %351 = vmatprep.subr.mxu0 0.0
    %352 = vmatpush1.msra.mxu0 0.0
    %353 = vmatprep.subr.mxu0 0.0
    %354 = vmatpush1.msra.mxu0 0.0
    %355 = vmatprep.mubr.f32.mxu0 0.0
    %356 = vmatmul.mubr.f32.gmra.mrb[0].mxu0 %v218
    %v357 = vpop.f32.mrb[0].mxu0
    %v358 = vadd.f32 0.0, %v357
    %v359 = vpop.f32.mrb[0].mxu0
    %360 = vdwg.mxu0
    %v361 = vld [vmem:[#allocation2 + $0xc8] sm:$0x1]
    %v362 = vld [vmem:[#allocation2 + $0xc9] sm:$0x1]
    %v363 = vld [vmem:[#allocation2 + $0xca] sm:$0x1]
    %v364 = vld [vmem:[#allocation2 + $0xcb] sm:$0x1]
    %v365 = vld [vmem:[#allocation2 + $0xcc] sm:$0x1]
    %v366 = vld [vmem:[#allocation2 + $0xcd] sm:$0x1]
    %v367 = vlaneseq
    %v368 = vshrl.u32 %v367, 7
    %v369 = vsub.s32 0, %v368
    %v370 = vrot.slane %v287, %v369
    %372 = vbcast.lane.b32.xlu0 %v370, 256
    %v373 = vpop.permute.xlu0 %372
    %v374 = vlaneseq
    %v375 = vshrl.u32 %v374, 7
    %v376 = vsub.s32 1, %v375
    %v377 = vrot.slane %v287, %v376
    %379 = vbcast.lane.b32.xlu0 %v377, 256
    %v380 = vpop.permute.xlu0 %379
    %v381 = vlaneseq
    %v382 = vshrl.u32 %v381, 7
    %v383 = vsub.s32 0, %v382
    %v384 = vrot.slane %v361, %v383
    %v385 = vmul.f32 %v373, %v384
    %v386 = vmul.f32 %v380, %v384
    %v387 = vlaneseq
    %v388 = vshrl.u32 %v387, 7
    %v389 = vsub.s32 0, %v388
    %v390 = vrot.slane %v28, %v389
    %s392 = sor.u32 256, 64
    %393 = vbcast.lane.b32.xlu0 %v390, %s392
    %v394 = vpop.permute.xlu0 %393
    %v395 = vlaneseq
    %v396 = vshrl.u32 %v395, 7
    %v397 = vsub.s32 1, %v396
    %v398 = vrot.slane %v28, %v397
    %s400 = sor.u32 256, 64
    %401 = vbcast.lane.b32.xlu0 %v398, %s400
    %v402 = vpop.permute.xlu0 %401
    %v403 = vlaneseq
    %v404 = vshrl.u32 %v403, 7
    %v405 = vsub.s32 0, %v404
    %v406 = vrot.slane %v362, %v405
    %v407 = vmul.f32 %v394, %v406
    %v408 = vmul.f32 %v402, %v406
    %v409 = vadd.f32 %v385, %v407
    %v410 = vadd.f32 %v386, %v408
    %v411 = vlaneseq
    %v412 = vshrl.u32 %v411, 7
    %v413 = vsub.s32 0, %v412
    %v414 = vrot.slane %v358, %v413
    %416 = vbcast.lane.b32.xlu0 %v414, 256
    %v417 = vpop.permute.xlu0 %416
    %v418 = vlaneseq
    %v419 = vshrl.u32 %v418, 7
    %v420 = vsub.s32 1, %v419
    %v421 = vrot.slane %v358, %v420
    %423 = vbcast.lane.b32.xlu0 %v421, 256
    %v424 = vpop.permute.xlu0 %423
    %v425 = vlaneseq
    %v426 = vshrl.u32 %v425, 7
    %v427 = vsub.s32 0, %v426
    %v428 = vrot.slane %v363, %v427
    %v429 = vmul.f32 %v417, %v428
    %v430 = vmul.f32 %v424, %v428
    %v431 = vadd.f32 %v409, %v429
    %v432 = vadd.f32 %v410, %v430
    %v433 = vld [vmem:[%s2] sm:$0xff]
    %v434 = vld [vmem:[%s2 + $0x8] sm:$0xff]
    %v435 = vld [vmem:[#allocation2 + $0x58] sm:$0xff]
    %v436 = vld [vmem:[#allocation2 + $0x60] sm:$0xff]
    %v437 = vld [vmem:[#allocation2 + $0x68] sm:$0xff]
    %v438 = vld [vmem:[#allocation2 + $0x70] sm:$0xff]
    %v440 = vsel %vm35, %v433, 0
    %v443 = vsel %vm35, %v434, 0
    %445 = vmatprep.subr.mxu0 0.0
    %446 = vmatpush1.msra.mxu0 %v435
    %447 = vmatprep.subr.mxu0 0.0
    %448 = vmatpush1.msra.mxu0 %v436
    %449 = vmatprep.subr.mxu0 0.0
    %450 = vmatpush1.msra.mxu0 %v437
    %451 = vmatprep.subr.mxu0 0.0
    %452 = vmatpush1.msra.mxu0 %v438
    %453 = vmatprep.subr.mxu0 0.0
    %454 = vmatpush1.msra.mxu0 0.0
    %455 = vmatprep.subr.mxu0 0.0
    %456 = vmatpush1.msra.mxu0 0.0
    %457 = vmatprep.subr.mxu0 0.0
    %458 = vmatpush1.msra.mxu0 0.0
    %459 = vmatprep.subr.mxu0 0.0
    %460 = vmatpush1.msra.mxu0 0.0
    %461 = vmatprep.subr.mxu0 0.0
    %462 = vmatpush1.msra.mxu0 0.0
    %463 = vmatprep.subr.mxu0 0.0
    %464 = vmatpush1.msra.mxu0 0.0
    %465 = vmatprep.subr.mxu0 0.0
    %466 = vmatpush1.msra.mxu0 0.0
    %467 = vmatprep.subr.mxu0 0.0
    %468 = vmatpush1.msra.mxu0 0.0
    %469 = vmatprep.subr.mxu0 0.0
    %470 = vmatpush1.msra.mxu0 0.0
    %471 = vmatprep.subr.mxu0 0.0
    %472 = vmatpush1.msra.mxu0 0.0
    %473 = vmatprep.subr.mxu0 0.0
    %474 = vmatpush1.msra.mxu0 0.0
    %475 = vmatprep.subr.mxu0 0.0
    %476 = vmatpush1.msra.mxu0 0.0
    %477 = vmatprep.subr.mxu0 0.0
    %478 = vmatpush1.msra.mxu0 0.0
    %479 = vmatprep.subr.mxu0 0.0
    %480 = vmatpush1.msra.mxu0 0.0
    %481 = vmatprep.subr.mxu0 0.0
    %482 = vmatpush1.msra.mxu0 0.0
    %483 = vmatprep.subr.mxu0 0.0
    %484 = vmatpush1.msra.mxu0 0.0
    %485 = vmatprep.subr.mxu0 0.0
    %486 = vmatpush1.msra.mxu0 0.0
    %487 = vmatprep.subr.mxu0 0.0
    %488 = vmatpush1.msra.mxu0 0.0
    %489 = vmatprep.subr.mxu0 0.0
    %490 = vmatpush1.msra.mxu0 0.0
    %491 = vmatprep.subr.mxu0 0.0
    %492 = vmatpush1.msra.mxu0 0.0
    %493 = vmatprep.subr.mxu0 0.0
    %494 = vmatpush1.msra.mxu0 0.0
    %495 = vmatprep.subr.mxu0 0.0
    %496 = vmatpush1.msra.mxu0 0.0
    %497 = vmatprep.subr.mxu0 0.0
    %498 = vmatpush1.msra.mxu0 0.0
    %499 = vmatprep.subr.mxu0 0.0
    %500 = vmatpush1.msra.mxu0 0.0
    %501 = vmatprep.subr.mxu0 0.0
    %502 = vmatpush1.msra.mxu0 0.0
    %503 = vmatprep.subr.mxu0 0.0
    %504 = vmatpush1.msra.mxu0 0.0
    %505 = vmatprep.subr.mxu0 0.0
    %506 = vmatpush1.msra.mxu0 0.0
    %507 = vmatprep.subr.mxu0 0.0
    %508 = vmatpush1.msra.mxu0 0.0
    %509 = vmatprep.mubr.f32.mxu0 0.0
    %510 = vmatmul.mubr.f32.gmra.mrb[0].mxu0 %v440
    %v511 = vpop.f32.mrb[0].mxu0
    %v512 = vadd.f32 0.0, %v511
    %v513 = vpop.f32.mrb[0].mxu0
    %514 = vmatprep.mubr.f32.mxu0 0.0
    %515 = vmatmul.mubr.f32.gmra.mrb[0].mxu0 %v443
    %v516 = vpop.f32.mrb[0].mxu0
    %v517 = vadd.f32 0.0, %v516
    %v518 = vpop.f32.mrb[0].mxu0
    %519 = vdwg.mxu0
    %v520 = vld [vmem:[#allocation2 + $0x38] sm:$0xff]
    %v521 = vld [vmem:[#allocation2 + $0x40] sm:$0xff]
    %v522 = vld [vmem:[#allocation2 + $0x48] sm:$0xff]
    %v523 = vld [vmem:[#allocation2 + $0x50] sm:$0xff]
    %525 = vrot.lane.b32.xlu0 %v213, 32
    %v526 = vpop.permute.xlu0 %525
    %v527 = vsel %vm35, %v526, 0
    %529 = vmatprep.subr.mxu0 0.0
    %530 = vmatpush1.msra.mxu0 %v520
    %531 = vmatprep.subr.mxu0 0.0
    %532 = vmatpush1.msra.mxu0 %v521
    %533 = vmatprep.subr.mxu0 0.0
    %534 = vmatpush1.msra.mxu0 %v522
    %535 = vmatprep.subr.mxu0 0.0
    %536 = vmatpush1.msra.mxu0 %v523
    %537 = vmatprep.subr.mxu0 0.0
    %538 = vmatpush1.msra.mxu0 0.0
    %539 = vmatprep.subr.mxu0 0.0
    %540 = vmatpush1.msra.mxu0 0.0
    %541 = vmatprep.subr.mxu0 0.0
    %542 = vmatpush1.msra.mxu0 0.0
    %543 = vmatprep.subr.mxu0 0.0
    %544 = vmatpush1.msra.mxu0 0.0
    %545 = vmatprep.subr.mxu0 0.0
    %546 = vmatpush1.msra.mxu0 0.0
    %547 = vmatprep.subr.mxu0 0.0
    %548 = vmatpush1.msra.mxu0 0.0
    %549 = vmatprep.subr.mxu0 0.0
    %550 = vmatpush1.msra.mxu0 0.0
    %551 = vmatprep.subr.mxu0 0.0
    %552 = vmatpush1.msra.mxu0 0.0
    %553 = vmatprep.subr.mxu0 0.0
    %554 = vmatpush1.msra.mxu0 0.0
    %555 = vmatprep.subr.mxu0 0.0
    %556 = vmatpush1.msra.mxu0 0.0
    %557 = vmatprep.subr.mxu0 0.0
    %558 = vmatpush1.msra.mxu0 0.0
    %559 = vmatprep.subr.mxu0 0.0
    %560 = vmatpush1.msra.mxu0 0.0
    %561 = vmatprep.subr.mxu0 0.0
    %562 = vmatpush1.msra.mxu0 0.0
    %563 = vmatprep.subr.mxu0 0.0
    %564 = vmatpush1.msra.mxu0 0.0
    %565 = vmatprep.subr.mxu0 0.0
    %566 = vmatpush1.msra.mxu0 0.0
    %567 = vmatprep.subr.mxu0 0.0
    %568 = vmatpush1.msra.mxu0 0.0
    %569 = vmatprep.subr.mxu0 0.0
    %570 = vmatpush1.msra.mxu0 0.0
    %571 = vmatprep.subr.mxu0 0.0
    %572 = vmatpush1.msra.mxu0 0.0
    %573 = vmatprep.subr.mxu0 0.0
    %574 = vmatpush1.msra.mxu0 0.0
    %575 = vmatprep.subr.mxu0 0.0
    %576 = vmatpush1.msra.mxu0 0.0
    %577 = vmatprep.subr.mxu0 0.0
    %578 = vmatpush1.msra.mxu0 0.0
    %579 = vmatprep.subr.mxu0 0.0
    %580 = vmatpush1.msra.mxu0 0.0
    %581 = vmatprep.subr.mxu0 0.0
    %582 = vmatpush1.msra.mxu0 0.0
    %583 = vmatprep.subr.mxu0 0.0
    %584 = vmatpush1.msra.mxu0 0.0
    %585 = vmatprep.subr.mxu0 0.0
    %586 = vmatpush1.msra.mxu0 0.0
    %587 = vmatprep.subr.mxu0 0.0
    %588 = vmatpush1.msra.mxu0 0.0
    %589 = vmatprep.subr.mxu0 0.0
    %590 = vmatpush1.msra.mxu0 0.0
    %591 = vmatprep.subr.mxu0 0.0
    %592 = vmatpush1.msra.mxu0 0.0
    %593 = vmatprep.mubr.f32.mxu0 0.0
    %594 = vmatmul.mubr.f32.gmra.mrb[0].mxu0 %v527
    %v595 = vpop.f32.mrb[0].mxu0
    %v596 = vadd.f32 0.0, %v595
    %v597 = vpop.f32.mrb[0].mxu0
    %598 = vdwg.mxu0
    %v601 = vunpack.c.l.s4 1966171168
    %v602 = vunpack.c.0.s8 %v601
    %v603 = vlaneseq
    %v604 = vshrl.u32 %v603, 7
    %v605 = vsub.s32 %v602, %v604
    %v606 = vrot.slane %v596, %v605
    %v607 = vcombine.high %v606, %v606
    %v609 = vunpack.c.l.s4 1966171168
    %v610 = vunpack.c.0.s8 %v609
    %v611 = vlaneseq
    %v612 = vshrl.u32 %v611, 7
    %v613 = vsub.s32 %v610, %v612
    %v614 = vrot.slane %v606, %v613
    %v616 = vunpack.c.l.s4 1966171168
    %v617 = vunpack.c.0.s8 %v616
    %v618 = vlaneseq
    %v619 = vshrl.u32 %v618, 7
    %v620 = vsub.s32 %v617, %v619
    %v621 = vrot.slane %v607, %v620
    %v622 = vlaneseq
    %v623 = vshrl.u32 %v622, 7
    %v624 = vsub.s32 0, %v623
    %v625 = vrot.slane %v614, %v624
    %v626 = vlaneseq
    %v627 = vshrl.u32 %v626, 7
    %v628 = vsub.s32 0, %v627
    %v629 = vrot.slane %v621, %v628
    %v632 = vadd.f32 %v625, %v512
    %v633 = vadd.f32 %v629, %v517
    %v634 = vadd.f32 %v632, %v431
    %v635 = vadd.f32 %v633, %v432
    %v636 = vlaneseq
    %v637 = vshrl.u32 %v636, 7
    %v638 = vsub.s32 0, %v637
    %v639 = vrot.slane %v364, %v638
    %v640 = vadd.f32 %v634, %v639
    %v641 = vadd.f32 %v635, %v639
    %v642 = vtanh.pop %v640
    %v643 = vtanh.pop %v641
    %v644 = vlaneseq
    %v645 = vshrl.u32 %v644, 7
    %v646 = vsub.s32 0, %v645
    %v647 = vrot.slane %v365, %v646
    %v648 = vmul.f32 %v642, %v647
    %v649 = vmul.f32 %v643, %v647
    %v650 = vsel %vm35, %v648, 0.0
    %651 = vadd.xlane.f32.xlu0 %v650
    %v652 = vpop.xlane.xlu0 %651
    %v653 = vsel %vm35, %v649, 0.0
    %654 = vadd.xlane.f32.xlu0 %v653
    %v655 = vpop.xlane.xlu0 %654
    %v658 = vlaneseq
    %v659 = vand.u32 %v658, 127
    %v660 = vlaneseq
    %v661 = vshrl.u32 %v660, 7
    %v662 = vsub.s32 %v659, %v661
    %v663 = vrot.slane %v652, %v662
    %v664 = vlaneseq
    %v665 = vshrl.u32 %v664, 7
    %v666 = vsub.s32 %v659, %v665
    %v667 = vrot.slane %v655, %v666
    %vm668 = vcmask 1041409
    %v669 = vsel %vm668, %v667, %v663
    %vm671 = vcmask 58368
    %v672 = vsel %vm671, %v669, -inf
    %673 = vmax.xlane.f32.xlu0 %v672
    %v674 = vpop.xlane.xlu0 %673
    %v676 = vlaneseq
    %v677 = vshrl.u32 %v676, 7
    %v678 = vsub.s32 0, %v677
    %v679 = vrot.slane %v674, %v678
    %v680 = vlaneseq
    %v681 = vshrl.u32 %v680, 7
    %v682 = vsub.s32 1, %v681
    %v683 = vrot.slane %v674, %v682
    %v686 = vsub.f32 %v652, %v679
    %v687 = vsub.f32 %v655, %v683
    %v688 = vmul.f32 %v686, 1.442695
    %v689 = vpow.pop %v688
    %v690 = vmul.f32 %v687, 1.442695
    %v691 = vpow.pop %v690
    %694 = vset.pattern.permute.xlu0 0
    %695 = vperm.xlu0 %694, %v689
    %v696 = vpop.permute.xlu0 %695
    %697 = vset.pattern.permute.xlu0 0
    %698 = vperm.xlu0 %697, %v691
    %v699 = vpop.permute.xlu0 %698
    %v700 = vlaneseq
    %v701 = vshrl.u32 %v700, 7
    %v702 = vsub.s32 %v659, %v701
    %v703 = vrot.slane %v696, %v702
    %v704 = vlaneseq
    %v705 = vshrl.u32 %v704, 7
    %v706 = vsub.s32 %v659, %v705
    %v707 = vrot.slane %v699, %v706
    %v708 = vsel %vm668, %v707, %v703
    %v710 = vsel %vm671, %v708, 0.0
    %711 = vadd.xlane.f32.xlu0 %v710
    %v712 = vpop.xlane.xlu0 %711
    %v713 = vrcp.pop %v712
    %v715 = vlaneseq
    %v716 = vshrl.u32 %v715, 7
    %v717 = vsub.s32 0, %v716
    %v718 = vrot.slane %v713, %v717
    %v719 = vlaneseq
    %v720 = vshrl.u32 %v719, 7
    %v721 = vsub.s32 1, %v720
    %v722 = vrot.slane %v713, %v721
    %v725 = vmul.f32 %v689, %v718
    %v726 = vmul.f32 %v691, %v722
    %728 = vset.pattern.permute.xlu0 0
    %729 = vperm.xlu0 %728, %v725
    %v730 = vpop.permute.xlu0 %729
    %733 = vset.pattern.permute.xlu0 0
    %734 = vperm.xlu0 %733, %v726
    %v735 = vpop.permute.xlu0 %734
    %v737 = vmul.f32 %v730, %v433
    %v738 = vmul.f32 %v735, %v434
    %v739 = vsel %vm35, %v737, 0.0
    %v740 = vrot.slane %v739, 4
    %v741 = vadd.f32 %v739, %v740
    %v742 = vrot.slane %v741, 2
    %v743 = vadd.f32 %v741, %v742
    %v744 = vrot.slane %v743, 1
    %v745 = vadd.f32 %v743, %v744
    %v746 = vsel %vm35, %v738, 0.0
    %v747 = vrot.slane %v746, 4
    %v748 = vadd.f32 %v746, %v747
    %v749 = vrot.slane %v748, 2
    %v750 = vadd.f32 %v748, %v749
    %v751 = vrot.slane %v750, 1
    %v752 = vadd.f32 %v750, %v751
    %v753 = vld [vmem:[#allocation2 + $0x78] sm:$0xff]
    %v754 = vld [vmem:[#allocation2 + $0x80] sm:$0xff]
    %v755 = vld [vmem:[#allocation2 + $0x88] sm:$0xff]
    %v756 = vld [vmem:[#allocation2 + $0x90] sm:$0xff]
    %v757 = vld [vmem:[#allocation2 + $0x98] sm:$0xff]
    %v758 = vld [vmem:[#allocation2 + $0xa0] sm:$0xff]
    %v759 = vld [vmem:[#allocation2 + $0xa8] sm:$0xff]
    %v760 = vld [vmem:[#allocation2 + $0xb0] sm:$0xff]
    %761 = vmatprep.subr.mxu0 0.0
    %762 = vmatpush1.msra.mxu0 %v757
    %763 = vmatprep.subr.mxu0 0.0
    %764 = vmatpush1.msra.mxu0 %v758
    %765 = vmatprep.subr.mxu0 0.0
    %766 = vmatpush1.msra.mxu0 %v759
    %767 = vmatprep.subr.mxu0 0.0
    %768 = vmatpush1.msra.mxu0 %v760
    %769 = vmatprep.subr.mxu0 0.0
    %770 = vmatpush1.msra.mxu0 0.0
    %771 = vmatprep.subr.mxu0 0.0
    %772 = vmatpush1.msra.mxu0 0.0
    %773 = vmatprep.subr.mxu0 0.0
    %774 = vmatpush1.msra.mxu0 0.0
    %775 = vmatprep.subr.mxu0 0.0
    %776 = vmatpush1.msra.mxu0 0.0
    %777 = vmatprep.subr.mxu0 0.0
    %778 = vmatpush1.msra.mxu0 0.0
    %779 = vmatprep.subr.mxu0 0.0
    %780 = vmatpush1.msra.mxu0 0.0
    %781 = vmatprep.subr.mxu0 0.0
    %782 = vmatpush1.msra.mxu0 0.0
    %783 = vmatprep.subr.mxu0 0.0
    %784 = vmatpush1.msra.mxu0 0.0
    %785 = vmatprep.subr.mxu0 0.0
    %786 = vmatpush1.msra.mxu0 0.0
    %787 = vmatprep.subr.mxu0 0.0
    %788 = vmatpush1.msra.mxu0 0.0
    %789 = vmatprep.subr.mxu0 0.0
    %790 = vmatpush1.msra.mxu0 0.0
    %791 = vmatprep.subr.mxu0 0.0
    %792 = vmatpush1.msra.mxu0 0.0
    %793 = vmatprep.subr.mxu0 0.0
    %794 = vmatpush1.msra.mxu0 0.0
    %795 = vmatprep.subr.mxu0 0.0
    %796 = vmatpush1.msra.mxu0 0.0
    %797 = vmatprep.subr.mxu0 0.0
    %798 = vmatpush1.msra.mxu0 0.0
    %799 = vmatprep.subr.mxu0 0.0
    %800 = vmatpush1.msra.mxu0 0.0
    %801 = vmatprep.subr.mxu0 0.0
    %802 = vmatpush1.msra.mxu0 0.0
    %803 = vmatprep.subr.mxu0 0.0
    %804 = vmatpush1.msra.mxu0 0.0
    %805 = vmatprep.subr.mxu0 0.0
    %806 = vmatpush1.msra.mxu0 0.0
    %807 = vmatprep.subr.mxu0 0.0
    %808 = vmatpush1.msra.mxu0 0.0
    %809 = vmatprep.subr.mxu0 0.0
    %810 = vmatpush1.msra.mxu0 0.0
    %811 = vmatprep.subr.mxu0 0.0
    %812 = vmatpush1.msra.mxu0 0.0
    %813 = vmatprep.subr.mxu0 0.0
    %814 = vmatpush1.msra.mxu0 0.0
    %815 = vmatprep.subr.mxu0 0.0
    %816 = vmatpush1.msra.mxu0 0.0
    %817 = vmatprep.subr.mxu0 0.0
    %818 = vmatpush1.msra.mxu0 0.0
    %819 = vmatprep.subr.mxu0 0.0
    %820 = vmatpush1.msra.mxu0 0.0
    %821 = vmatprep.subr.mxu0 0.0
    %822 = vmatpush1.msra.mxu0 0.0
    %823 = vmatprep.subr.mxu0 0.0
    %824 = vmatpush1.msra.mxu0 0.0
    %825 = vmatprep.mubr.f32.mxu0 0.0
    %826 = vmatmul.mubr.f32.gmra.mrb[0].mxu0 %v527
    %v827 = vpop.f32.mrb[0].mxu0
    %v828 = vadd.f32 0.0, %v827
    %v829 = vpop.f32.mrb[0].mxu0
    %830 = vdwg.mxu0
    %v833 = vsel %vm668, %v752, %v745
    %v834 = vsel %vm35, %v833, 0
    %836 = vmatprep.subr.mxu0 0.0
    %837 = vmatpush1.msra.mxu0 %v753
    %838 = vmatprep.subr.mxu0 0.0
    %839 = vmatpush1.msra.mxu0 %v754
    %840 = vmatprep.subr.mxu0 0.0
    %841 = vmatpush1.msra.mxu0 %v755
    %842 = vmatprep.subr.mxu0 0.0
    %843 = vmatpush1.msra.mxu0 %v756
    %844 = vmatprep.subr.mxu0 0.0
    %845 = vmatpush1.msra.mxu0 0.0
    %846 = vmatprep.subr.mxu0 0.0
    %847 = vmatpush1.msra.mxu0 0.0
    %848 = vmatprep.subr.mxu0 0.0
    %849 = vmatpush1.msra.mxu0 0.0
    %850 = vmatprep.subr.mxu0 0.0
    %851 = vmatpush1.msra.mxu0 0.0
    %852 = vmatprep.subr.mxu0 0.0
    %853 = vmatpush1.msra.mxu0 0.0
    %854 = vmatprep.subr.mxu0 0.0
    %855 = vmatpush1.msra.mxu0 0.0
    %856 = vmatprep.subr.mxu0 0.0
    %857 = vmatpush1.msra.mxu0 0.0
    %858 = vmatprep.subr.mxu0 0.0
    %859 = vmatpush1.msra.mxu0 0.0
    %860 = vmatprep.subr.mxu0 0.0
    %861 = vmatpush1.msra.mxu0 0.0
    %862 = vmatprep.subr.mxu0 0.0
    %863 = vmatpush1.msra.mxu0 0.0
    %864 = vmatprep.subr.mxu0 0.0
    %865 = vmatpush1.msra.mxu0 0.0
    %866 = vmatprep.subr.mxu0 0.0
    %867 = vmatpush1.msra.mxu0 0.0
    %868 = vmatprep.subr.mxu0 0.0
    %869 = vmatpush1.msra.mxu0 0.0
    %870 = vmatprep.subr.mxu0 0.0
    %871 = vmatpush1.msra.mxu0 0.0
    %872 = vmatprep.subr.mxu0 0.0
    %873 = vmatpush1.msra.mxu0 0.0
    %874 = vmatprep.subr.mxu0 0.0
    %875 = vmatpush1.msra.mxu0 0.0
    %876 = vmatprep.subr.mxu0 0.0
    %877 = vmatpush1.msra.mxu0 0.0
    %878 = vmatprep.subr.mxu0 0.0
    %879 = vmatpush1.msra.mxu0 0.0
    %880 = vmatprep.subr.mxu0 0.0
    %881 = vmatpush1.msra.mxu0 0.0
    %882 = vmatprep.subr.mxu0 0.0
    %883 = vmatpush1.msra.mxu0 0.0
    %884 = vmatprep.subr.mxu0 0.0
    %885 = vmatpush1.msra.mxu0 0.0
    %886 = vmatprep.subr.mxu0 0.0
    %887 = vmatpush1.msra.mxu0 0.0
    %888 = vmatprep.subr.mxu0 0.0
    %889 = vmatpush1.msra.mxu0 0.0
    %890 = vmatprep.subr.mxu0 0.0
    %891 = vmatpush1.msra.mxu0 0.0
    %892 = vmatprep.subr.mxu0 0.0
    %893 = vmatpush1.msra.mxu0 0.0
    %894 = vmatprep.subr.mxu0 0.0
    %895 = vmatpush1.msra.mxu0 0.0
    %896 = vmatprep.subr.mxu0 0.0
    %897 = vmatpush1.msra.mxu0 0.0
    %898 = vmatprep.subr.mxu0 0.0
    %899 = vmatpush1.msra.mxu0 0.0
    %900 = vmatprep.mubr.f32.mxu0 0.0
    %901 = vmatmul.mubr.f32.gmra.mrb[0].mxu0 %v834
    %v902 = vpop.f32.mrb[0].mxu0
    %v903 = vadd.f32 %v828, %v902
    %v904 = vpop.f32.mrb[0].mxu0
    %905 = vdwg.mxu0
    %v906 = vlaneseq
    %v907 = vshrl.u32 %v906, 7
    %v908 = vsub.s32 0, %v907
    %v909 = vrot.slane %v366, %v908
    %v910 = vadd.f32 %v903, %v909
    %vm911 = vcmask 123904
    %v912 = vsel %vm911, %v910, -inf
    %913 = vmax.xlane.f32.xlu0 %v912
    %v914 = vpop.xlane.xlu0 %913
    %v915 = vsub.f32 %v910, %v914
    %v916 = vmul.f32 %v915, 1.442695
    %v917 = vpow.pop %v916
    %v918 = vsel %vm911, %v917, 0.0
    %919 = vadd.xlane.f32.xlu0 %v918
    %v920 = vpop.xlane.xlu0 %919
    %v921 = vlog2.pop %v920
    %v922 = vmul.f32 %v921, 0.6931472
    %v923 = vadd.f32 %v922, %v914
    %924 = vst [vmem:[%s3] sm:$0x3] 0.0
    %v925 = vsub.f32 %v910, %v923
    %926 = vst.msk [vmem:[%s3] sm:$0x3] %vm911, %v925
    %927 = vrot.lane.b32.xlu0 %v213, 48
    %v928 = vpop.permute.xlu0 %927
    %vm930 = vcmask 386176
    %931 = vst.msk [vmem:[%s3] sm:$0x3] %vm930, %v928
    %933 = vrot.lane.b32.xlu0 %v207, 16
    %v934 = vpop.permute.xlu0 %933
    %vm936 = vcmask 648576
    %937 = vst.msk [vmem:[%s3] sm:$0x3] %vm936, %v934
    %v938 = vadd.s32 %v659, 4294967216
    %v939 = vlaneseq
    %v940 = vshrl.u32 %v939, 7
    %v941 = vsub.s32 %v938, %v940
    %v942 = vrot.slane %v730, %v941
    %v943 = vlaneseq
    %v944 = vshrl.u32 %v943, 7
    %v945 = vsub.s32 %v938, %v944
    %v946 = vrot.slane %v735, %v945
    %v947 = vsel %vm668, %v946, %v942
    %vm949 = vcmask 714368
    %950 = vst.msk [vmem:[%s3] sm:$0x3] %vm949, %v947
    // Predicated region
    $region18: #{decoder_forward.1} parent=1 // pred_check
      _
    $region19: #{decoder_forward.1} parent=1 // pred_check_branch
      %952 = sbr.rel (0) target = $region21
    $region20: #{decoder_forward.1} parent=1 // pred_region
      _
    $region21: #{decoder_forward.1} parent=1 // pred_fallthru
      _
    // Predicated region
    $region22: #{decoder_forward.1} parent=1 // pred_check
      _
    $region23: #{decoder_forward.1} parent=1 // pred_check_branch
      %954 = sbr.rel (0) target = $region25
    $region24: #{decoder_forward.1} parent=1 // pred_region
      _
    $region25: #{decoder_forward.1} parent=1 // pred_fallthru
      _
    %955 = vsyncpa [#allocation3], 1

</llo_original>
